<compile_context>
chip_gen: v7x
topology: tpu7x:2x2x1
jax: 0.10.0
libtpu: 0.0.40
codegen_flags: <defaults>
</compile_context>

<pallas_src>
import functools

import jax
import jax.numpy as jnp
from jax import lax
from jax.experimental import pallas as pl
from jax.experimental.pallas import tpu as pltpu

EPS = 1e-5
MOMENTUM = 0.9


# --------------------------------------------------------------------------
# Block-size budgeting
# --------------------------------------------------------------------------
def _vmem_budget_bytes():
    """Per-buffer block budget.  ~2 MiB keeps phase-2 (x in + y out, double-
    buffered) well under the 16 MiB v5e default scoped-VMEM limit; on v7x the
    faster HBM makes 4 MiB blocks worthwhile (fits its 32 MiB default)."""
    try:
        kind = jax.devices()[0].device_kind.lower()
        if "v7" in kind or "7x" in kind:
            return 4 * 1024 * 1024
    except Exception:
        pass
    return 2 * 1024 * 1024


def _pick_nchw_block(n, c, hw, budget):
    """Pick (N_b, T) for an (N_b, C, T) f32 block of ~`budget` bytes.
    T must be a multiple of 128 dividing HW, or HW itself."""
    if hw % 128 == 0:
        if 4 * c * hw <= budget:
            t = hw
        else:
            cap_t = max(128, (budget // (4 * c)) // 128 * 128)
            t = 128
            for cand in range(min(cap_t, hw), 127, -128):
                if hw % cand == 0:
                    t = cand
                    break
    else:
        t = hw  # full-dim block is the only legal choice for the lane axis
    cap_n = max(1, budget // (4 * c * t))
    if n <= cap_n:
        nb = n
    else:
        nb = 1
        for cand in range(min(cap_n, n), 0, -1):
            if n % cand == 0:
                nb = cand
                break
    return nb, t


def _pick_rows(nf, kc, budget):
    """Pick a row-tile for an (NT, kc) f32 block of ~`budget` bytes.
    NT must be a multiple of 8 dividing nf, or nf itself."""
    cap = max(1, budget // (4 * kc))
    if nf <= cap:
        return nf
    start = min(cap, nf)
    start -= start % 8
    for cand in range(start, 7, -8):
        if nf % cand == 0:
            return cand
    return nf  # no multiple-of-8 divisor fits; take the full dim


# --------------------------------------------------------------------------
# Phase 1 kernels: independent per-block partial sum / sum-of-squares
# --------------------------------------------------------------------------
def _stats_partial_nchw_kernel(x_ref, ps_ref, pq_ref, *, lane_chunks):
    # x_ref: (N_b, C, T).  ps/pq: (C, T // lane_chunks) lane-dense partials.
    x = x_ref[...].astype(jnp.float32)
    s = jnp.sum(x, axis=0)        # (C, T) — plain vreg adds over the batch block
    q = jnp.sum(x * x, axis=0)    # (C, T)
    if lane_chunks > 1:
        lanes = s.shape[-1] // lane_chunks        # == 128
        acc_s = s[:, :lanes]
        acc_q = q[:, :lanes]
        for j in range(1, lane_chunks):           # static, unrolled; VPU-only
            acc_s = acc_s + s[:, j * lanes:(j + 1) * lanes]
            acc_q = acc_q + q[:, j * lanes:(j + 1) * lanes]
        ps_ref[...] = acc_s
        pq_ref[...] = acc_q
    else:
        ps_ref[...] = s
        pq_ref[...] = q


def _stats_partial_2d_kernel(x_ref, ps_ref, pq_ref):
    # x_ref: (NT, kC) — batch(-folded) on sublanes, channels lane-dense.
    x = x_ref[...].astype(jnp.float32)
    ps_ref[...] = jnp.sum(x, axis=0, keepdims=True)      # (1, kC)
    pq_ref[...] = jnp.sum(x * x, axis=0, keepdims=True)  # (1, kC)


# --------------------------------------------------------------------------
# Phase 2 kernels: y = x * scale + shift  (fully parallel streaming pass)
# --------------------------------------------------------------------------
def _apply_nchw_kernel(x_ref, scale_ref, shift_ref, y_ref):
    x = x_ref[...].astype(jnp.float32)        # (N_b, C, T)
    scale = scale_ref[...][None, :, :]        # (1, C, 1)
    shift = shift_ref[...][None, :, :]
    y_ref[...] = (x * scale + shift).astype(y_ref.dtype)


def _apply_2d_kernel(x_ref, scale_ref, shift_ref, y_ref):
    x = x_ref[...].astype(jnp.float32)        # (NT, kC)
    y_ref[...] = (x * scale_ref[...] + shift_ref[...]).astype(y_ref.dtype)


# --------------------------------------------------------------------------
# Finalize (tiny per-channel math, plain JAX)
# --------------------------------------------------------------------------
def _finalize_stats(s, sq, count, gamma_c, beta_c, mm_c, mv_c):
    inv = 1.0 / float(count)
    mean = s * inv
    var = jnp.maximum(sq * inv - mean * mean, 0.0)
    scale = gamma_c * lax.rsqrt(var + EPS)
    shift = beta_c - mean * scale
    new_mm = MOMENTUM * mm_c + (1.0 - MOMENTUM) * mean
    new_mv = MOMENTUM * mv_c + (1.0 - MOMENTUM) * var
    return scale, shift, new_mm, new_mv


# --------------------------------------------------------------------------
# Drivers
# --------------------------------------------------------------------------
def _bn_nchw(x3, gamma_c, beta_c, mm_c, mv_c, budget):
    """x3: (N, C, HW); per-channel params are (C,) f32."""
    N, C, HW = x3.shape
    nb, t = _pick_nchw_block(N, C, HW, budget)
    gn, gt = N // nb, HW // t
    lane_chunks = t // 128 if t % 128 == 0 else 1
    l_out = t // lane_chunks

    x_spec = pl.BlockSpec((nb, C, t), lambda n, tt: (n, 0, tt))
    p_spec = pl.BlockSpec((None, None, C, l_out), lambda n, tt: (n, tt, 0, 0))

    ps, pq = pl.pallas_call(
        functools.partial(_stats_partial_nchw_kernel, lane_chunks=lane_chunks),
        grid=(gn, gt),
        in_specs=[x_spec],
        out_specs=(p_spec, p_spec),
        out_shape=(jax.ShapeDtypeStruct((gn, gt, C, l_out), jnp.float32),
                   jax.ShapeDtypeStruct((gn, gt, C, l_out), jnp.float32)),
        compiler_params=pltpu.CompilerParams(
            dimension_semantics=("parallel", "parallel")),
    )(x3)

    s = ps.sum(axis=(0, 1, 3))     # (C,)  tiny cross-block reduce in JAX
    sq = pq.sum(axis=(0, 1, 3))
    scale, shift, new_mm, new_mv = _finalize_stats(
        s, sq, N * HW, gamma_c, beta_c, mm_c, mv_c)

    sc2 = scale.reshape(C, 1)
    sh2 = shift.reshape(C, 1)
    param_spec = pl.BlockSpec((C, 1), lambda n, tt: (0, 0))

    y3 = pl.pallas_call(
        _apply_nchw_kernel,
        grid=(gn, gt),
        in_specs=[x_spec, param_spec, param_spec],
        out_specs=x_spec,
        out_shape=jax.ShapeDtypeStruct((N, C, HW), x3.dtype),
        compiler_params=pltpu.CompilerParams(
            dimension_semantics=("parallel", "parallel")),
    )(x3, sc2, sh2)

    return y3, new_mm, new_mv


def _bn_2d(x, gamma_c, beta_c, mm_c, mv_c, budget):
    """x: (N, C); per-channel params are (C,) f32."""
    N, C = x.shape
    # Fold batch rows into lanes when C < 128 so blocks / stores are lane-dense.
    k = 1
    if C < 128 and 128 % C == 0:
        cand = 128 // C
        if N % cand == 0:
            k = cand
    nf, kc = N // k, k * C
    xf = x.reshape(nf, kc)                       # free contiguous view

    nt = _pick_rows(nf, kc, budget)
    gb = nf // nt

    x_spec = pl.BlockSpec((nt, kc), lambda i: (i, 0))
    p_spec = pl.BlockSpec((None, 1, kc), lambda i: (i, 0, 0))

    ps, pq = pl.pallas_call(
        _stats_partial_2d_kernel,
        grid=(gb,),
        in_specs=[x_spec],
        out_specs=(p_spec, p_spec),
        out_shape=(jax.ShapeDtypeStruct((gb, 1, kc), jnp.float32),
                   jax.ShapeDtypeStruct((gb, 1, kc), jnp.float32)),
        compiler_params=pltpu.CompilerParams(
            dimension_semantics=("parallel",)),
    )(xf)

    s = ps.reshape(gb * k, C).sum(axis=0)        # (C,)
    sq = pq.reshape(gb * k, C).sum(axis=0)
    scale, shift, new_mm, new_mv = _finalize_stats(
        s, sq, N, gamma_c, beta_c, mm_c, mv_c)

    scf = jnp.tile(scale.reshape(1, C), (1, k))  # (1, kC) lane-dense params
    shf = jnp.tile(shift.reshape(1, C), (1, k))
    param_spec = pl.BlockSpec((1, kc), lambda i: (0, 0))

    yf = pl.pallas_call(
        _apply_2d_kernel,
        grid=(gb,),
        in_specs=[x_spec, param_spec, param_spec],
        out_specs=x_spec,
        out_shape=jax.ShapeDtypeStruct((nf, kc), x.dtype),
        compiler_params=pltpu.CompilerParams(
            dimension_semantics=("parallel",)),
    )(xf, scf, shf)

    return yf.reshape(N, C), new_mm, new_mv


# --------------------------------------------------------------------------
# Public forward matching batch_morm() (training branch)
# --------------------------------------------------------------------------
def batch_norm_forward(X, gamma, beta, moving_mean, moving_var):
    """X: (N, C) or (N, C, H, W); params broadcast-shaped ((1,C) or (1,C,1,1)).
    Returns (Y, new_moving_mean, new_moving_var) in the original param shapes."""
    assert X.ndim in (2, 4)
    param_shape = moving_mean.shape
    budget = _vmem_budget_bytes()

    if X.ndim == 4:
        N, C, H, W = X.shape
        x3 = X.reshape(N, C, H * W)              # free view, no transpose
        g = gamma.reshape(C).astype(jnp.float32)
        b = beta.reshape(C).astype(jnp.float32)
        mm = moving_mean.reshape(C).astype(jnp.float32)
        mv = moving_var.reshape(C).astype(jnp.float32)
        y3, new_mm, new_mv = _bn_nchw(x3, g, b, mm, mv, budget)
        Y = y3.reshape(N, C, H, W)
    else:
        N, C = X.shape
        g = gamma.reshape(C).astype(jnp.float32)
        b = beta.reshape(C).astype(jnp.float32)
        mm = moving_mean.reshape(C).astype(jnp.float32)
        mv = moving_var.reshape(C).astype(jnp.float32)
        Y, new_mm, new_mv = _bn_2d(X, g, b, mm, mv, budget)

    return (Y,
            new_mm.reshape(param_shape).astype(moving_mean.dtype),
            new_mv.reshape(param_shape).astype(moving_var.dtype))


# --------------------------------------------------------------------------
# Pure-JAX reference (same semantics as the PyTorch batch_morm training branch)
# --------------------------------------------------------------------------
def _reference(X, gamma, beta, moving_mean, moving_var):
    axes = (0, 2, 3) if X.ndim == 4 else (0,)
    mean = X.mean(axis=axes, keepdims=True)
    var = ((X - mean) ** 2).mean(axis=axes, keepdims=True)
    X_hat = (X - mean) / jnp.sqrt(var + EPS)
    Y = gamma * X_hat + beta
    new_mm = MOMENTUM * moving_mean + (1.0 - MOMENTUM) * mean
    new_mv = MOMENTUM * moving_var + (1.0 - MOMENTUM) * var
    return Y, new_mm, new_mv


if __name__ == "__main__":
    key = jax.random.PRNGKey(0)
    k1, k2 = jax.random.split(key)

    # --- 4D case (NCHW), matching BatchNorm(num_features=C, num_dims=4) ---
    N, C, H, W = 2, 4, 16, 16
    X = jax.random.normal(k1, (N, C, H, W), dtype=jnp.float32)
    shape4 = (1, C, 1, 1)
    gamma = jnp.ones(shape4, jnp.float32)
    beta = jnp.zeros(shape4, jnp.float32)
    moving_mean = jnp.zeros(shape4, jnp.float32)
    moving_var = jnp.ones(shape4, jnp.float32)

    Y, nmm, nmv = batch_norm_forward(X, gamma, beta, moving_mean, moving_var)
    jax.block_until_ready((Y, nmm, nmv))
    Yr, mmr, mvr = _reference(X, gamma, beta, moving_mean, moving_var)
    assert jnp.allclose(Y, Yr, atol=1e-4, rtol=1e-4)
    assert jnp.allclose(nmm, mmr, atol=1e-5, rtol=1e-5)
    assert jnp.allclose(nmv, mvr, atol=1e-5, rtol=1e-5)

    # --- 2D case, matching BatchNorm(num_features=C, num_dims=2) ---
    N2, C2 = 16, 8
    X2 = jax.random.normal(k2, (N2, C2), dtype=jnp.float32)
    shape2 = (1, C2)
    gamma2 = jnp.ones(shape2, jnp.float32)
    beta2 = jnp.zeros(shape2, jnp.float32)
    mm2 = jnp.zeros(shape2, jnp.float32)
    mv2 = jnp.ones(shape2, jnp.float32)

    Y2, nmm2, nmv2 = batch_norm_forward(X2, gamma2, beta2, mm2, mv2)
    jax.block_until_ready((Y2, nmm2, nmv2))
    Y2r, mm2r, mv2r = _reference(X2, gamma2, beta2, mm2, mv2)
    assert jnp.allclose(Y2, Y2r, atol=1e-4, rtol=1e-4)
    assert jnp.allclose(nmm2, mm2r, atol=1e-5, rtol=1e-5)
    assert jnp.allclose(nmv2, mv2r, atol=1e-5, rtol=1e-5)

    print("KERNEL_OK")
</pallas_src>

<mosaic_0001>
module attributes {stable_mosaic.version = 11 : i64} {
  func.func @_stats_partial_nchw_kernel(%arg0: i32, %arg1: i32, %arg2: memref<2x4x256xf32, #tpu.memory_space<vmem>>, %arg3: memref<1x1x4x128xf32, #tpu.memory_space<vmem>>, %arg4: memref<1x1x4x128xf32, #tpu.memory_space<vmem>>) attributes {dimension_semantics = [#tpu.dimension_semantics<parallel>, #tpu.dimension_semantics<parallel>], iteration_bounds = array<i64: 1, 1>, scalar_prefetch = 0 : i64, scratch_operands = 0 : i64, tpu.core_type = #tpu.core_type<tc>, window_params = [{transform_indices = @transform_0, window_bounds = array<i64: 2, 4, 256>}, {transform_indices = @transform_1, window_bounds = array<i64: 1, 1, 4, 128>}, {transform_indices = @transform_2, window_bounds = array<i64: 1, 1, 4, 128>}]} {
    %c0 = arith.constant 0 : index
    %c0_0 = arith.constant 0 : index
    %c0_1 = arith.constant 0 : index
    %0 = vector.load %arg2[%c0, %c0_0, %c0_1] : memref<2x4x256xf32, #tpu.memory_space<vmem>>, vector<2x4x256xf32>
    %cst = arith.constant dense<0.000000e+00> : vector<4x256xf32>
    %1 = vector.multi_reduction <add>, %0, %cst [0] : vector<2x4x256xf32> to vector<4x256xf32>
    %2 = arith.mulf %0, %0 : vector<2x4x256xf32>
    %cst_2 = arith.constant dense<0.000000e+00> : vector<4x256xf32>
    %3 = vector.multi_reduction <add>, %2, %cst_2 [0] : vector<2x4x256xf32> to vector<4x256xf32>
    %4 = vector.extract_strided_slice %1 {offsets = [0, 0], sizes = [4, 128], strides = [1, 1]} : vector<4x256xf32> to vector<4x128xf32>
    %5 = vector.extract_strided_slice %3 {offsets = [0, 0], sizes = [4, 128], strides = [1, 1]} : vector<4x256xf32> to vector<4x128xf32>
    %6 = vector.extract_strided_slice %1 {offsets = [0, 128], sizes = [4, 128], strides = [1, 1]} : vector<4x256xf32> to vector<4x128xf32>
    %7 = arith.addf %4, %6 : vector<4x128xf32>
    %8 = vector.extract_strided_slice %3 {offsets = [0, 128], sizes = [4, 128], strides = [1, 1]} : vector<4x256xf32> to vector<4x128xf32>
    %9 = arith.addf %5, %8 : vector<4x128xf32>
    %c0_3 = arith.constant 0 : index
    %c0_4 = arith.constant 0 : index
    %c0_5 = arith.constant 0 : index
    %c0_6 = arith.constant 0 : index
    %10 = vector.load %arg3[%c0_3, %c0_4, %c0_5, %c0_6] : memref<1x1x4x128xf32, #tpu.memory_space<vmem>>, vector<1x1x4x128xf32>
    %11 = vector.shape_cast %10 : vector<1x1x4x128xf32> to vector<4x128xf32>
    %12 = vector.shape_cast %7 : vector<4x128xf32> to vector<1x1x4x128xf32>
    tpu.vector_store %arg3[%c0_3, %c0_4, %c0_5, %c0_6], %12 {strides = array<i32>} : memref<1x1x4x128xf32, #tpu.memory_space<vmem>>, vector<1x1x4x128xf32>,
    %c0_7 = arith.constant 0 : index
    %c0_8 = arith.constant 0 : index
    %c0_9 = arith.constant 0 : index
    %c0_10 = arith.constant 0 : index
    %13 = vector.load %arg4[%c0_7, %c0_8, %c0_9, %c0_10] : memref<1x1x4x128xf32, #tpu.memory_space<vmem>>, vector<1x1x4x128xf32>
    %14 = vector.shape_cast %13 : vector<1x1x4x128xf32> to vector<4x128xf32>
    %15 = vector.shape_cast %9 : vector<4x128xf32> to vector<1x1x4x128xf32>
    tpu.vector_store %arg4[%c0_7, %c0_8, %c0_9, %c0_10], %15 {strides = array<i32>} : memref<1x1x4x128xf32, #tpu.memory_space<vmem>>, vector<1x1x4x128xf32>,
    return
  }
  func.func @transform_0(%arg0: i32, %arg1: i32) -> (i32, i32, i32) {
    %c0_i32 = arith.constant 0 : i32
    %c0_i32_0 = arith.constant 0 : i32
    return %arg0, %c0_i32, %arg1 : i32, i32, i32
  }
  func.func @transform_1(%arg0: i32, %arg1: i32) -> (i32, i32, i32, i32) {
    %c0_i32 = arith.constant 0 : i32
    %c0_i32_0 = arith.constant 0 : i32
    %c0_i32_1 = arith.constant 0 : i32
    return %arg0, %arg1, %c0_i32, %c0_i32_0 : i32, i32, i32, i32
  }
  func.func @transform_2(%arg0: i32, %arg1: i32) -> (i32, i32, i32, i32) {
    %c0_i32 = arith.constant 0 : i32
    %c0_i32_0 = arith.constant 0 : i32
    %c0_i32_1 = arith.constant 0 : i32
    return %arg0, %arg1, %c0_i32, %c0_i32_0 : i32, i32, i32, i32
  }
}

</mosaic_0001>

<llo_original>
// kernel: tpu_custom_call.1
$region0: #{tpu_custom_call.1}
  #allocation0 [shape = 'u32[]', space=smem, size = 0x4, offset = 0x4, fixed_abs, tag = 'smem constant byte address 0x4 - core index']
  #allocation1 [shape = 'u32[144,128]{1,0:T(1,128)}', space=vmem, size = 0x12000, scoped, tag = 'internal scratch']
  %s0 = inlined_call_operand.hbm [shape: f32[2,4,256], index: 0, kind: input, shape index: {}]
  %s1 = inlined_call_operand.hbm [shape: f32[1,1,4,128], index: 1, kind: output, shape index: {0}]
  %s2 = inlined_call_operand.hbm [shape: f32[1,1,4,128], index: 2, kind: output, shape index: {1}]
  %3 = xla_tuple %s1, %s2
  %s4 = sld [smem:[#allocation0]]
  $region26: #{tpu_custom_call.1} parent=0
    _
  %s6 = ssub.s32 1, %s4
  %s7 = scalar_select 0, %s6, %s4
  $region1: #{tpu_custom_call.1} parent=0
    #allocation2 [shape = 'u8[8192]{0}', space=vmem, size = 0x2000, scoped, tag = 'input window, operand 0, single buffered']
    #allocation3 [shape = 's32[1]{0}', space=sflag, size = 0x4, scoped, tag = 'scoped memory for tpu_custom_call.1']
    #allocation4 [shape = 's32[1]{0}', space=sflag, size = 0x4, scoped, tag = 'scoped memory for tpu_custom_call.1']
    #allocation5 [shape = 'u8[2048]{0}', space=vmem, size = 0x800, scoped, tag = 'output window, operand 0, single buffered']
    #allocation6 [shape = 'u8[2048]{0}', space=vmem, size = 0x800, scoped, tag = 'output window, operand 1, single buffered']
    #allocation7 [shape = 's32[1]{0}', space=sflag, size = 0x4, scoped, tag = 'scoped memory for tpu_custom_call.1']
    %8 = vsyncpa [#allocation3], 0
    %9 = vsyncpa [#allocation4], 0
    %10 = vsyncpa [#allocation7], 0
    // Predicated region
    $region2: #{tpu_custom_call.1} parent=1 // pred_check
      _
    $region3: #{tpu_custom_call.1} parent=1 // pred_check_branch
      %12 = sbr.rel (0) target = $region5
    $region4: #{tpu_custom_call.1} parent=1 // pred_region
      %s14 = ssub.s32 256, 256
      %15 = vsyncadd [#allocation3], %s14
      %s16 = sshll.u32 [#allocation2], 4
      %s17 = int_to_ptr.vmem [resolvable:$true] %s16
      %22 = dma.hbm_to_vmem [thread:$0]  %s0, 256, %s17, [#allocation3], 128, 128, 8
    $region5: #{tpu_custom_call.1} parent=1 // pred_fallthru
      _
    // Predicated region
    $region6: #{tpu_custom_call.1} parent=1 // pred_check
      _
    $region7: #{tpu_custom_call.1} parent=1 // pred_check_branch
      %24 = sbr.rel (0) target = $region9
    $region8: #{tpu_custom_call.1} parent=1 // pred_region
      %25 = dma.done [#allocation3], 256
    $region9: #{tpu_custom_call.1} parent=1 // pred_fallthru
      _
    %v26 = vld [vmem:[#allocation2] sm:$0xff]
    %v27 = vld [vmem:[#allocation2 + $0x8] sm:$0xff]
    %v30 = vcombine.high %v26, %v26
    %v31 = vcombine.high %v27, %v27
    %vm34 = vcmask 1043456
    %v35 = vsel %vm34, %v26, 0.0
    %v36 = vsel %vm34, %v27, 0.0
    %v37 = vadd.f32 %v35, %v36
    %v38 = vsel %vm34, %v30, 0.0
    %v39 = vsel %vm34, %v31, 0.0
    %v40 = vadd.f32 %v38, %v39
    %v41 = vmul.f32 %v26, %v26
    %v42 = vmul.f32 %v27, %v27
    %v45 = vcombine.high %v41, %v41
    %v46 = vcombine.high %v42, %v42
    %v49 = vsel %vm34, %v41, 0.0
    %v50 = vsel %vm34, %v42, 0.0
    %v51 = vadd.f32 %v49, %v50
    %v52 = vsel %vm34, %v45, 0.0
    %v53 = vsel %vm34, %v46, 0.0
    %v54 = vadd.f32 %v52, %v53
    %v55 = vadd.f32 %v37, %v40
    %v56 = vadd.f32 %v51, %v54
    %57 = vst [vmem:[#allocation5] sm:$0xf] %v55
    %58 = vst [vmem:[#allocation6] sm:$0xf] %v56
    // Predicated region
    $region10: #{tpu_custom_call.1} parent=1 // pred_check
      _
    $region11: #{tpu_custom_call.1} parent=1 // pred_check_branch
      %60 = sbr.rel (0) target = $region13
    $region12: #{tpu_custom_call.1} parent=1 // pred_region
      %s62 = ssub.s32 64, 64
      %63 = vsyncadd [#allocation4], %s62
      %s65 = sshll.u32 [#allocation5], 4
      %s66 = int_to_ptr.vmem [resolvable:$true] %s65
      %68 = dma.vmem_to_hbm [thread:$0]  %s66, 64, %s1, [#allocation4]
    $region13: #{tpu_custom_call.1} parent=1 // pred_fallthru
      _
    // Predicated region
    $region14: #{tpu_custom_call.1} parent=1 // pred_check
      _
    $region15: #{tpu_custom_call.1} parent=1 // pred_check_branch
      %70 = sbr.rel (0) target = $region17
    $region16: #{tpu_custom_call.1} parent=1 // pred_region
      %s72 = ssub.s32 64, 64
      %73 = vsyncadd [#allocation7], %s72
      %s75 = sshll.u32 [#allocation6], 4
      %s76 = int_to_ptr.vmem [resolvable:$true] %s75
      %78 = dma.vmem_to_hbm [thread:$0]  %s76, 64, %s2, [#allocation7]
    $region17: #{tpu_custom_call.1} parent=1 // pred_fallthru
      _
    // Predicated region
    $region18: #{tpu_custom_call.1} parent=1 // pred_check
      _
    $region19: #{tpu_custom_call.1} parent=1 // pred_check_branch
      %80 = sbr.rel (0) target = $region21
    $region20: #{tpu_custom_call.1} parent=1 // pred_region
      %81 = dma.done [#allocation4], 64
    $region21: #{tpu_custom_call.1} parent=1 // pred_fallthru
      _
    // Predicated region
    $region22: #{tpu_custom_call.1} parent=1 // pred_check
      _
    $region23: #{tpu_custom_call.1} parent=1 // pred_check_branch
      %83 = sbr.rel (0) target = $region25
    $region24: #{tpu_custom_call.1} parent=1 // pred_region
      %84 = dma.done [#allocation7], 64
    $region25: #{tpu_custom_call.1} parent=1 // pred_fallthru
      _
    %85 = vsyncpa [#allocation3], 1
    %86 = vsyncpa [#allocation4], 1
    %87 = vsyncpa [#allocation7], 1

</llo_original>
